<compile_context>
chip_gen: v6e
topology: v6e:2x2x1
jax: 0.10.0
libtpu: 0.0.40
codegen_flags: <defaults>
</compile_context>

<pallas_src>
import jax
import jax.numpy as jnp
from jax.experimental import pallas as pl
from jax.experimental.pallas import tpu as pltpu


def _dice_loss_kernel(pred_ref, tgt_ref, valid_ref, out_ref, num_acc, den_acc):
    n = pl.program_id(1)

    # Zero the per-batch accumulators at the start of each N sweep.
    @pl.when(n == 0)
    def _():
        num_acc[...] = jnp.zeros_like(num_acc)
        den_acc[...] = jnp.zeros_like(den_acc)

    # Cast in-kernel: inputs stay in their native (possibly bf16) dtype in HBM.
    p = pred_ref[...].astype(jnp.float32)    # (1, tn, K)
    t = tgt_ref[...].astype(jnp.float32)     # (1, tn, K)
    v = valid_ref[...].astype(jnp.float32)   # (1, tn, 1) -> broadcast over K

    pv = p * v
    tv = t * v
    num_acc[...] += pv * t                   # == pred * target * valid
    den_acc[...] += pv + tv                  # == (pred + target) * valid

    # Finalize: one sublane reduce + the dice nonlinearity per batch row.
    @pl.when(n == pl.num_programs(1) - 1)
    def _():
        num = 2.0 * jnp.sum(num_acc[...], axis=1, keepdims=True)  # (1, 1, K)
        den = jnp.sum(den_acc[...], axis=1, keepdims=True)        # (1, 1, K)
        out_ref[...] = 1.0 - (num + 1.0) / (den + 1.0)


def _pick_row_tile(N, K, itemsize, budget_bytes=8 << 20):
    """Largest N-tile (multiple of 8, divisor of N) within a VMEM byte budget.

    Budget covers pred+target (2 inputs x 2 pipeline buffers), the two f32
    accumulators and the valid block; 8 MiB stays comfortably inside the
    scoped-VMEM default on every generation (v7x's 64 MiB physical included).
    """
    per_row = K * (2 * 2 * itemsize + 2 * 4) + 2 * 4
    cap = max(8, int(budget_bytes) // int(per_row))
    if N <= cap:
        return N
    start = cap - (cap % 8)
    for tn in range(start, 7, -8):
        if N % tn == 0:
            return tn
    return N  # rare fallback (N has no multiple-of-8 divisor); un-tiled N.


def dice_loss(pred, target, valid=None, *, row_tile=None):
    """pred, target: (B, N, K); valid: (B, N) or None. Returns scalar loss."""
    B, N, K = pred.shape
    if valid is None:
        valid3 = jnp.ones((B, N, 1), dtype=jnp.float32)
    else:
        # valid is K-times smaller than pred; an f32 copy is negligible traffic.
        valid3 = valid.astype(jnp.float32).reshape(B, N, 1)

    tn = row_tile if row_tile is not None else _pick_row_tile(
        N, K, jnp.dtype(pred.dtype).itemsize)
    assert N % tn == 0, (N, tn)

    loss_bk = pl.pallas_call(
        _dice_loss_kernel,
        out_shape=jax.ShapeDtypeStruct((B, 1, K), jnp.float32),
        grid_spec=pltpu.PrefetchScalarGridSpec(
            num_scalar_prefetch=0,
            grid=(B, N // tn),
            in_specs=[
                pl.BlockSpec((1, tn, K), lambda b, n: (b, n, 0)),
                pl.BlockSpec((1, tn, K), lambda b, n: (b, n, 0)),
                pl.BlockSpec((1, tn, 1), lambda b, n: (b, n, 0)),
            ],
            out_specs=pl.BlockSpec((1, 1, K), lambda b, n: (b, 0, 0)),
            scratch_shapes=[
                pltpu.VMEM((1, tn, K), jnp.float32),
                pltpu.VMEM((1, tn, K), jnp.float32),
            ],
        ),
        compiler_params=pltpu.CompilerParams(
            dimension_semantics=("parallel", "arbitrary")),
    )(pred, target, valid3)

    # Tiny (B, 1, K) -> scalar reduction; cheaper in the wrapper than
    # serializing a scalar accumulator across the parallel batch axis.
    return jnp.mean(loss_bk)


def _dice_loss_ref(pred, target, valid=None):
    """Pure-JAX reference mirroring the PyTorch DiceLoss.forward."""
    pred = pred.astype(jnp.float32)
    target = target.astype(jnp.float32)
    if valid is not None:
        v = valid.astype(jnp.float32)[:, :, None]
        numerator = (2.0 * (pred * target) * v).sum(1)
        denominator = (pred * v).sum(1) + (target * v).sum(1)
    else:
        numerator = 2.0 * (pred * target).sum(1)
        denominator = pred.sum(1) + target.sum(1)
    loss = 1.0 - (numerator + 1.0) / (denominator + 1.0)
    return loss.mean()


if __name__ == "__main__":
    # DiceLoss — deterministic synthetic inputs, (B, N, K) as the forward implies.
    B, N, K = 2, 256, 32
    key = jax.random.PRNGKey(0)
    k1, k2, k3 = jax.random.split(key, 3)

    pred = jax.nn.sigmoid(jax.random.normal(k1, (B, N, K), dtype=jnp.float32))
    target = (jax.random.uniform(k2, (B, N, K)) > 0.5).astype(jnp.float32)
    valid = (jax.random.uniform(k3, (B, N)) > 0.3).astype(jnp.float32)

    # f32 inputs, with valid mask.
    loss = dice_loss(pred, target, valid)
    jax.block_until_ready(loss)
    ref = _dice_loss_ref(pred, target, valid)
    assert jnp.allclose(loss, ref, rtol=1e-5, atol=1e-6), (loss, ref)

    # valid=None path.
    loss_nv = dice_loss(pred, target, None)
    jax.block_until_ready(loss_nv)
    ref_nv = _dice_loss_ref(pred, target, None)
    assert jnp.allclose(loss_nv, ref_nv, rtol=1e-5, atol=1e-6), (loss_nv, ref_nv)

    # bf16 inputs stay bf16 on the HBM side; cast to f32 happens in-kernel.
    pred_bf = pred.astype(jnp.bfloat16)
    target_bf = target.astype(jnp.bfloat16)
    loss_bf = dice_loss(pred_bf, target_bf, valid)
    jax.block_until_ready(loss_bf)
    ref_bf = _dice_loss_ref(pred_bf.astype(jnp.float32),
                            target_bf.astype(jnp.float32), valid)
    assert jnp.allclose(loss_bf, ref_bf, rtol=1e-4, atol=1e-5), (loss_bf, ref_bf)

    print("KERNEL_OK")
</pallas_src>

<mosaic_0001>
module attributes {stable_mosaic.version = 11 : i64} {
  func.func @_dice_loss_kernel(%arg0: i32, %arg1: i32, %arg2: memref<1x256x32xf32, #tpu.memory_space<vmem>>, %arg3: memref<1x256x32xf32, #tpu.memory_space<vmem>>, %arg4: memref<1x256x1xf32, #tpu.memory_space<vmem>>, %arg5: memref<1x1x32xf32, #tpu.memory_space<vmem>>, %arg6: memref<1x256x32xf32, #tpu.memory_space<vmem>>, %arg7: memref<1x256x32xf32, #tpu.memory_space<vmem>>) attributes {dimension_semantics = [#tpu.dimension_semantics<parallel>, #tpu.dimension_semantics<arbitrary>], iteration_bounds = array<i64: 2, 1>, scalar_prefetch = 0 : i64, scratch_operands = 2 : i64, tpu.core_type = #tpu.core_type<tc>, window_params = [{transform_indices = @transform_0, window_bounds = array<i64: 1, 256, 32>}, {transform_indices = @transform_1, window_bounds = array<i64: 1, 256, 32>}, {transform_indices = @transform_2, window_bounds = array<i64: 1, 256, 1>}, {transform_indices = @transform_3, window_bounds = array<i64: 1, 1, 32>}]} {
    %c0_i32 = arith.constant 0 : i32
    %0 = arith.cmpi eq, %arg1, %c0_i32 : i32
    %1 = arith.extui %0 : i1 to i32
    %c0_i32_0 = arith.constant 0 : i32
    %2 = arith.cmpi ne, %1, %c0_i32_0 : i32
    scf.if %2 {
      %cst = arith.constant 0.000000e+00 : f32
      %21 = vector.broadcast %cst : f32 to vector<1x256x32xf32>
      %c0_23 = arith.constant 0 : index
      %c0_24 = arith.constant 0 : index
      %c0_25 = arith.constant 0 : index
      %22 = vector.load %arg6[%c0_23, %c0_24, %c0_25] : memref<1x256x32xf32, #tpu.memory_space<vmem>>, vector<1x256x32xf32>
      tpu.vector_store %arg6[%c0_23, %c0_24, %c0_25], %21 {strides = array<i32>} : memref<1x256x32xf32, #tpu.memory_space<vmem>>, vector<1x256x32xf32>,
      %cst_26 = arith.constant 0.000000e+00 : f32
      %23 = vector.broadcast %cst_26 : f32 to vector<1x256x32xf32>
      %c0_27 = arith.constant 0 : index
      %c0_28 = arith.constant 0 : index
      %c0_29 = arith.constant 0 : index
      %24 = vector.load %arg7[%c0_27, %c0_28, %c0_29] : memref<1x256x32xf32, #tpu.memory_space<vmem>>, vector<1x256x32xf32>
      tpu.vector_store %arg7[%c0_27, %c0_28, %c0_29], %23 {strides = array<i32>} : memref<1x256x32xf32, #tpu.memory_space<vmem>>, vector<1x256x32xf32>,
    } else {
    }
    %c0 = arith.constant 0 : index
    %c0_1 = arith.constant 0 : index
    %c0_2 = arith.constant 0 : index
    %3 = vector.load %arg2[%c0, %c0_1, %c0_2] : memref<1x256x32xf32, #tpu.memory_space<vmem>>, vector<1x256x32xf32>
    %c0_3 = arith.constant 0 : index
    %c0_4 = arith.constant 0 : index
    %c0_5 = arith.constant 0 : index
    %4 = vector.load %arg3[%c0_3, %c0_4, %c0_5] : memref<1x256x32xf32, #tpu.memory_space<vmem>>, vector<1x256x32xf32>
    %c0_6 = arith.constant 0 : index
    %c0_7 = arith.constant 0 : index
    %c0_8 = arith.constant 0 : index
    %5 = vector.load %arg4[%c0_6, %c0_7, %c0_8] : memref<1x256x1xf32, #tpu.memory_space<vmem>>, vector<1x256x1xf32>
    %6 = vector.broadcast %5 : vector<1x256x1xf32> to vector<1x256x32xf32>
    %7 = arith.mulf %3, %6 : vector<1x256x32xf32>
    %8 = vector.broadcast %5 : vector<1x256x1xf32> to vector<1x256x32xf32>
    %9 = arith.mulf %4, %8 : vector<1x256x32xf32>
    %c0_9 = arith.constant 0 : index
    %c0_10 = arith.constant 0 : index
    %c0_11 = arith.constant 0 : index
    %10 = vector.load %arg6[%c0_9, %c0_10, %c0_11] : memref<1x256x32xf32, #tpu.memory_space<vmem>>, vector<1x256x32xf32>
    %11 = arith.mulf %7, %4 : vector<1x256x32xf32>
    %12 = arith.addf %10, %11 : vector<1x256x32xf32>
    %c0_12 = arith.constant 0 : index
    %c0_13 = arith.constant 0 : index
    %c0_14 = arith.constant 0 : index
    %13 = vector.load %arg6[%c0_12, %c0_13, %c0_14] : memref<1x256x32xf32, #tpu.memory_space<vmem>>, vector<1x256x32xf32>
    tpu.vector_store %arg6[%c0_12, %c0_13, %c0_14], %12 {strides = array<i32>} : memref<1x256x32xf32, #tpu.memory_space<vmem>>, vector<1x256x32xf32>,
    %c0_15 = arith.constant 0 : index
    %c0_16 = arith.constant 0 : index
    %c0_17 = arith.constant 0 : index
    %14 = vector.load %arg7[%c0_15, %c0_16, %c0_17] : memref<1x256x32xf32, #tpu.memory_space<vmem>>, vector<1x256x32xf32>
    %15 = arith.addf %7, %9 : vector<1x256x32xf32>
    %16 = arith.addf %14, %15 : vector<1x256x32xf32>
    %c0_18 = arith.constant 0 : index
    %c0_19 = arith.constant 0 : index
    %c0_20 = arith.constant 0 : index
    %17 = vector.load %arg7[%c0_18, %c0_19, %c0_20] : memref<1x256x32xf32, #tpu.memory_space<vmem>>, vector<1x256x32xf32>
    tpu.vector_store %arg7[%c0_18, %c0_19, %c0_20], %16 {strides = array<i32>} : memref<1x256x32xf32, #tpu.memory_space<vmem>>, vector<1x256x32xf32>,
    %c0_i32_21 = arith.constant 0 : i32
    %18 = arith.cmpi eq, %arg1, %c0_i32_21 : i32
    %19 = arith.extui %18 : i1 to i32
    %c0_i32_22 = arith.constant 0 : i32
    %20 = arith.cmpi ne, %19, %c0_i32_22 : i32
    scf.if %20 {
      %c0_23 = arith.constant 0 : index
      %c0_24 = arith.constant 0 : index
      %c0_25 = arith.constant 0 : index
      %21 = vector.load %arg6[%c0_23, %c0_24, %c0_25] : memref<1x256x32xf32, #tpu.memory_space<vmem>>, vector<1x256x32xf32>
      %cst = arith.constant dense<0.000000e+00> : vector<1x32xf32>
      %22 = vector.multi_reduction <add>, %21, %cst [1] : vector<1x256x32xf32> to vector<1x32xf32>
      %23 = vector.shape_cast %22 : vector<1x32xf32> to vector<1x1x32xf32>
      %cst_26 = arith.constant 2.000000e+00 : f32
      %24 = vector.broadcast %cst_26 : f32 to vector<1x1x32xf32>
      %25 = arith.mulf %24, %23 : vector<1x1x32xf32>
      %c0_27 = arith.constant 0 : index
      %c0_28 = arith.constant 0 : index
      %c0_29 = arith.constant 0 : index
      %26 = vector.load %arg7[%c0_27, %c0_28, %c0_29] : memref<1x256x32xf32, #tpu.memory_space<vmem>>, vector<1x256x32xf32>
      %cst_30 = arith.constant dense<0.000000e+00> : vector<1x32xf32>
      %27 = vector.multi_reduction <add>, %26, %cst_30 [1] : vector<1x256x32xf32> to vector<1x32xf32>
      %28 = vector.shape_cast %27 : vector<1x32xf32> to vector<1x1x32xf32>
      %cst_31 = arith.constant 1.000000e+00 : f32
      %29 = vector.broadcast %cst_31 : f32 to vector<1x1x32xf32>
      %30 = arith.addf %25, %29 : vector<1x1x32xf32>
      %cst_32 = arith.constant 1.000000e+00 : f32
      %31 = vector.broadcast %cst_32 : f32 to vector<1x1x32xf32>
      %32 = arith.addf %28, %31 : vector<1x1x32xf32>
      %33 = arith.divf %30, %32 : vector<1x1x32xf32>
      %cst_33 = arith.constant 1.000000e+00 : f32
      %34 = vector.broadcast %cst_33 : f32 to vector<1x1x32xf32>
      %35 = arith.subf %34, %33 : vector<1x1x32xf32>
      %c0_34 = arith.constant 0 : index
      %c0_35 = arith.constant 0 : index
      %c0_36 = arith.constant 0 : index
      %36 = vector.load %arg5[%c0_34, %c0_35, %c0_36] : memref<1x1x32xf32, #tpu.memory_space<vmem>>, vector<1x1x32xf32>
      tpu.vector_store %arg5[%c0_34, %c0_35, %c0_36], %35 {strides = array<i32>} : memref<1x1x32xf32, #tpu.memory_space<vmem>>, vector<1x1x32xf32>,
    } else {
    }
    return
  }
  func.func @transform_0(%arg0: i32, %arg1: i32) -> (i32, i32, i32) {
    %c0_i32 = arith.constant 0 : i32
    %c0_i32_0 = arith.constant 0 : i32
    return %arg0, %arg1, %c0_i32 : i32, i32, i32
  }
  func.func @transform_1(%arg0: i32, %arg1: i32) -> (i32, i32, i32) {
    %c0_i32 = arith.constant 0 : i32
    %c0_i32_0 = arith.constant 0 : i32
    return %arg0, %arg1, %c0_i32 : i32, i32, i32
  }
  func.func @transform_2(%arg0: i32, %arg1: i32) -> (i32, i32, i32) {
    %c0_i32 = arith.constant 0 : i32
    %c0_i32_0 = arith.constant 0 : i32
    return %arg0, %arg1, %c0_i32 : i32, i32, i32
  }
  func.func @transform_3(%arg0: i32, %arg1: i32) -> (i32, i32, i32) {
    %c0_i32 = arith.constant 0 : i32
    %c0_i32_0 = arith.constant 0 : i32
    %c0_i32_1 = arith.constant 0 : i32
    return %arg0, %c0_i32, %c0_i32_0 : i32, i32, i32
  }
}

</mosaic_0001>

<llo_original>
// kernel: tpu_custom_call.1
$region0: #{tpu_custom_call.1}
  #allocation0 [shape = 'u32[]', space=smem, size = 0x4, offset = 0x4, fixed_abs, tag = 'smem constant byte address 0x4 - core index']
  #allocation1 [shape = 'u32[144,128]{1,0:T(1,128)}', space=vmem, size = 0x12000, scoped, tag = 'internal scratch']
  #allocation2 [shape = 'f32[1,256,32]{2,1,0:T(8,128)}', space=vmem, size = 0x20000, scoped, tag = 'scratch operand']
  #allocation3 [shape = 'f32[1,256,32]{2,1,0:T(8,128)}', space=vmem, size = 0x20000, scoped, tag = 'scratch operand']
  %s0 = inlined_call_operand.vmem [shape: f32[2,256,32], index: 0, kind: input, shape index: {}]
  %s1 = inlined_call_operand.vmem [shape: f32[2,256,32], index: 1, kind: input, shape index: {}]
  %s2 = inlined_call_operand.vmem [shape: f32[2,256,1], index: 2, kind: input, shape index: {}]
  %s3 = inlined_call_operand.hbm [shape: f32[2,1,32], index: 3, kind: output, shape index: {}]
  %s4 = sld [smem:[#allocation0]]
  $region53: #{tpu_custom_call.1} parent=0
    _
  %s6 = ssub.s32 1, %s4
  %s7 = scalar_select 0, %s6, %s4
  $region1: #{tpu_custom_call.1} parent=0
    #allocation4 [shape = 'u8[1024]{0}', space=vmem, size = 0x400, scoped, tag = 'output window, operand 0']
    #allocation5 [shape = 's32[2]{0}', space=sflag, size = 0x8, scoped, tag = 'scoped memory for tpu_custom_call.1']
    %8 = vsyncpa [#allocation5], 0
    %s9 = scalar_lea.sflag [#allocation5], 1
    %10 = vsyncpa %s9, 0
    loop: start=0, step=1, limit=4
    $region2: #{tpu_custom_call.1} parent=1 // loop_pre_header
      _
    $region3: #{tpu_custom_call.1} parent=1 // loop_header
      %s12 = sphi 0, %s16
      %p13 = scmp.ge.s32.totalorder %s12, 4
      %s19 = sphi 0, %s31
      %s20 = sphi 0, %s27
      %s21 = sphi 0, %s19
      %s22 = sphi 0, %s20
      %s23 = sphi 0, %s21
      %s24 = sphi 0, %s22
      %s36 = sphi 0, %s38
      %s39 = sphi 0, %s36
      %s40 = sphi 0, %s39
      %s56 = sphi 0, %s40
      %s64 = sphi 0, %s66
      %s67 = sphi 0, %s64
      %s68 = sphi 0, %s67
      %s84 = sphi 0, %s68
      %s92 = sphi 0, %s94
      %s95 = sphi 0, %s92
      %s96 = sphi 0, %s95
      %s112 = sphi 0, %s96
      %s118 = sphi 0, %s120
      %s121 = sphi 0, %s118
      %s122 = sphi 0, %s121
      %s138 = sphi 0, %s122
    $region4: #{tpu_custom_call.1} parent=1 // loop_header_branch
      %15 = sbr.rel (%p13) target = $region8
    $region5: #{tpu_custom_call.1} parent=1 // loop_body
      %s17 = ssub.s32 %s12, 1
      %s18 = ssub.s32 %s12, 2
      %s25 = sadd.s32 1, %s20
      %p26 = scmp.ge.s32.totalorder %s25, 1
      %s27 = scalar_select %p26, 0, %s25
      %s28 = sadd.s32 1, %s19
      %s29 = scalar_select %p26, %s28, %s19
      %p30 = scmp.ge.s32.totalorder %s29, 2
      %s31 = scalar_select %p30, 0, %s29
      %s32 = ssub.s32 %s19, %s31
      %s33 = ssub.s32 %s20, %s27
      %s34 = sor.u32 %s32, %s33
      %p35 = scmp.eq.s32.totalorder %s34, 0
      %s37 = sadd.s32 %s36, 1
      %s38 = scalar_select %p35, %s36, %s37
      %p41 = pneg %p35
      %p42 = scmp.eq.s32.totalorder %s12, 1
      %p43 = por %p41, %p42
      %p44 = scmp.ne.s32.totalorder %s36, %s39
      %p45 = scmp.eq.s32.totalorder %s12, 0
      %p46 = por %p44, %p45
      %p47 = scmp.ne.s32.totalorder %s36, %s39
      %p48 = scmp.eq.s32.totalorder %s17, 1
      %p49 = por %p47, %p48
      %p50 = scmp.ne.s32.totalorder %s39, %s40
      %p51 = scmp.eq.s32.totalorder %s17, 0
      %p52 = por %p50, %p51
      %p53 = scmp.ne.s32.totalorder %s39, %s40
      %p54 = scmp.eq.s32.totalorder %s18, 1
      %p55 = por %p53, %p54
      %p57 = scmp.ne.s32.totalorder %s40, %s56
      %p58 = scmp.eq.s32.totalorder %s18, 0
      %p59 = por %p57, %p58
      %s60 = ssub.s32 %s19, %s31
      %s61 = ssub.s32 %s20, %s27
      %s62 = sor.u32 %s60, %s61
      %p63 = scmp.eq.s32.totalorder %s62, 0
      %s65 = sadd.s32 %s64, 1
      %s66 = scalar_select %p63, %s64, %s65
      %p69 = pneg %p63
      %p70 = scmp.eq.s32.totalorder %s12, 1
      %p71 = por %p69, %p70
      %p72 = scmp.ne.s32.totalorder %s64, %s67
      %p73 = scmp.eq.s32.totalorder %s12, 0
      %p74 = por %p72, %p73
      %p75 = scmp.ne.s32.totalorder %s64, %s67
      %p76 = scmp.eq.s32.totalorder %s17, 1
      %p77 = por %p75, %p76
      %p78 = scmp.ne.s32.totalorder %s67, %s68
      %p79 = scmp.eq.s32.totalorder %s17, 0
      %p80 = por %p78, %p79
      %p81 = scmp.ne.s32.totalorder %s67, %s68
      %p82 = scmp.eq.s32.totalorder %s18, 1
      %p83 = por %p81, %p82
      %p85 = scmp.ne.s32.totalorder %s68, %s84
      %p86 = scmp.eq.s32.totalorder %s18, 0
      %p87 = por %p85, %p86
      %s88 = ssub.s32 %s19, %s31
      %s89 = ssub.s32 %s20, %s27
      %s90 = sor.u32 %s88, %s89
      %p91 = scmp.eq.s32.totalorder %s90, 0
      %s93 = sadd.s32 %s92, 1
      %s94 = scalar_select %p91, %s92, %s93
      %p97 = pneg %p91
      %p98 = scmp.eq.s32.totalorder %s12, 1
      %p99 = por %p97, %p98
      %p100 = scmp.ne.s32.totalorder %s92, %s95
      %p101 = scmp.eq.s32.totalorder %s12, 0
      %p102 = por %p100, %p101
      %p103 = scmp.ne.s32.totalorder %s92, %s95
      %p104 = scmp.eq.s32.totalorder %s17, 1
      %p105 = por %p103, %p104
      %p106 = scmp.ne.s32.totalorder %s95, %s96
      %p107 = scmp.eq.s32.totalorder %s17, 0
      %p108 = por %p106, %p107
      %p109 = scmp.ne.s32.totalorder %s95, %s96
      %p110 = scmp.eq.s32.totalorder %s18, 1
      %p111 = por %p109, %p110
      %p113 = scmp.ne.s32.totalorder %s96, %s112
      %p114 = scmp.eq.s32.totalorder %s18, 0
      %p115 = por %p113, %p114
      %s116 = ssub.s32 %s19, %s31
      %p117 = scmp.eq.s32.totalorder %s116, 0
      %s119 = sadd.s32 %s118, 1
      %s120 = scalar_select %p117, %s118, %s119
      %p123 = pneg %p117
      %p124 = scmp.eq.s32.totalorder %s12, 1
      %p125 = por %p123, %p124
      %p126 = scmp.ne.s32.totalorder %s118, %s121
      %p127 = scmp.eq.s32.totalorder %s12, 0
      %p128 = por %p126, %p127
      %p129 = scmp.ne.s32.totalorder %s118, %s121
      %p130 = scmp.eq.s32.totalorder %s17, 1
      %p131 = por %p129, %p130
      %p132 = scmp.ne.s32.totalorder %s121, %s122
      %p133 = scmp.eq.s32.totalorder %s17, 0
      %p134 = por %p132, %p133
      %p135 = scmp.ne.s32.totalorder %s121, %s122
      %p136 = scmp.eq.s32.totalorder %s18, 1
      %p137 = por %p135, %p136
      %p139 = scmp.ne.s32.totalorder %s122, %s138
      %p140 = scmp.eq.s32.totalorder %s18, 0
      %p141 = por %p139, %p140
      %p142 = scmp.le.s32.totalorder 1, %s12
      %p143 = scmp.lt.s32.totalorder %s12, 3
      %p144 = pnand %p142, %p143
      %p145 = pneg %p144
      // Predicated region
      $region9: #{tpu_custom_call.1} parent=5 // pred_check
        _
      $region10: #{tpu_custom_call.1} parent=5 // pred_check_branch
        %147 = sbr.rel (%p144) target = $region12
      $region11: #{tpu_custom_call.1} parent=5 // pred_region
        %s148 = ssub.s32 %s12, 1
      $region12: #{tpu_custom_call.1} parent=5 // pred_fallthru
        _
      %p149 = scmp.lt.s32.totalorder %s12, 2
      // Predicated region
      $region13: #{tpu_custom_call.1} parent=5 // pred_check
        %p150 = pneg %p149
      $region14: #{tpu_custom_call.1} parent=5 // pred_check_branch
        %152 = sbr.rel (%p150) target = $region16
      $region15: #{tpu_custom_call.1} parent=5 // pred_region
        // Predicated region
        $region17: #{tpu_custom_call.1} parent=15 // pred_check
          %p153 = pneg %p46
        $region18: #{tpu_custom_call.1} parent=15 // pred_check_branch
          %155 = sbr.rel (%p153) target = $region20
        $region19: #{tpu_custom_call.1} parent=15 // pred_region
          %s156 = smul.u32 32, %s20
          %p157 = scmp.lt.s32.totalorder %s19, 1
          %s158 = scalar_select %p157, %s19, 1
          %p159 = scmp.lt.s32.totalorder %s156, 31
          %s160 = scalar_select %p159, %s156, 31
          %s161 = smul.addr %s158, 32
          %s162 = sadd.s32 %s160, %s161
          %s163 = smul.addr %s162, 8
          %s164 = scalar_lea.vmem %s0, %s163
          %s165 = smul.u32 32, %s20
        $region20: #{tpu_custom_call.1} parent=15 // pred_fallthru
          _
        // Predicated region
        $region21: #{tpu_custom_call.1} parent=15 // pred_check
          %p166 = pneg %p74
        $region22: #{tpu_custom_call.1} parent=15 // pred_check_branch
          %168 = sbr.rel (%p166) target = $region24
        $region23: #{tpu_custom_call.1} parent=15 // pred_region
          %s169 = smul.u32 32, %s20
          %p170 = scmp.lt.s32.totalorder %s19, 1
          %s171 = scalar_select %p170, %s19, 1
          %p172 = scmp.lt.s32.totalorder %s169, 31
          %s173 = scalar_select %p172, %s169, 31
          %s174 = smul.addr %s171, 32
          %s175 = sadd.s32 %s173, %s174
          %s176 = smul.addr %s175, 8
          %s177 = scalar_lea.vmem %s1, %s176
          %s178 = smul.u32 32, %s20
        $region24: #{tpu_custom_call.1} parent=15 // pred_fallthru
          _
        // Predicated region
        $region25: #{tpu_custom_call.1} parent=15 // pred_check
          %p179 = pneg %p102
        $region26: #{tpu_custom_call.1} parent=15 // pred_check_branch
          %181 = sbr.rel (%p179) target = $region28
        $region27: #{tpu_custom_call.1} parent=15 // pred_region
          %s182 = smul.u32 32, %s20
          %p183 = scmp.lt.s32.totalorder %s19, 1
          %s184 = scalar_select %p183, %s19, 1
          %p185 = scmp.lt.s32.totalorder %s182, 31
          %s186 = scalar_select %p185, %s182, 31
          %s187 = smul.addr %s184, 32
          %s188 = sadd.s32 %s186, %s187
          %s189 = smul.addr %s188, 8
          %s190 = scalar_lea.vmem %s2, %s189
          %s191 = smul.u32 32, %s20
        $region28: #{tpu_custom_call.1} parent=15 // pred_fallthru
          _
      $region16: #{tpu_custom_call.1} parent=5 // pred_fallthru
        _
      %p192 = scmp.le.s32.totalorder 1, %s12
      %p193 = scmp.lt.s32.totalorder %s12, 3
      %p194 = pnand %p192, %p193
      %p195 = pneg %p194
      // Predicated region
      $region29: #{tpu_custom_call.1} parent=5 // pred_check
        _
      $region30: #{tpu_custom_call.1} parent=5 // pred_check_branch
        %197 = sbr.rel (%p194) target = $region32
      $region31: #{tpu_custom_call.1} parent=5 // pred_region
        %s198 = ssub.s32 %s12, 1
        %s199 = smul.u32 32, %s22
        %p200 = scmp.lt.s32.totalorder %s21, 1
        %s201 = scalar_select %p200, %s21, 1
        %p202 = scmp.lt.s32.totalorder %s199, 31
        %s203 = scalar_select %p202, %s199, 31
        %s204 = smul.addr %s201, 32
        %s205 = sadd.s32 %s203, %s204
        %s206 = smul.addr %s205, 8
        %s207 = scalar_lea.vmem %s0, %s206
        %p208 = pneg %p52
        %p209 = pneg %p49
        %s210 = smul.u32 32, %s22
        %p211 = scmp.lt.s32.totalorder %s21, 1
        %s212 = scalar_select %p211, %s21, 1
        %p213 = scmp.lt.s32.totalorder %s210, 31
        %s214 = scalar_select %p213, %s210, 31
        %s215 = smul.addr %s212, 32
        %s216 = sadd.s32 %s214, %s215
        %s217 = smul.addr %s216, 8
        %s218 = scalar_lea.vmem %s1, %s217
        %p219 = pneg %p80
        %p220 = pneg %p77
        %s221 = smul.u32 32, %s22
        %p222 = scmp.lt.s32.totalorder %s21, 1
        %s223 = scalar_select %p222, %s21, 1
        %p224 = scmp.lt.s32.totalorder %s221, 31
        %s225 = scalar_select %p224, %s221, 31
        %s226 = smul.addr %s223, 32
        %s227 = sadd.s32 %s225, %s226
        %s228 = smul.addr %s227, 8
        %s229 = scalar_lea.vmem %s2, %s228
        %p230 = pneg %p108
        %p231 = pneg %p105
        %p232 = pneg %p134
        %p233 = pneg %p131
        %s234 = sand.u32 %s121, 1
        %s235 = scalar_lea.sflag [#allocation5], %s234
        %s236 = sand.u32 %s121, 1
        %s237 = scalar_lea.vmem [#allocation4], %s236
        %s238 = smul.u32 32, %s22
        %p239 = scmp.lt.s32.totalorder %s21, 1
        %s240 = scalar_select %p239, %s21, 1
        %p241 = scmp.lt.s32.totalorder %s238, 31
        %s242 = scalar_select %p241, %s238, 31
        %s243 = smul.addr %s240, 32
        %s244 = sadd.s32 %s242, %s243
        %s245 = smul.addr %s244, 8
        %s246 = scalar_lea.vmem %s0, %s245
        %s247 = smul.u32 32, %s22
        %s248 = smul.u32 32, %s22
        %p249 = scmp.lt.s32.totalorder %s21, 1
        %s250 = scalar_select %p249, %s21, 1
        %p251 = scmp.lt.s32.totalorder %s248, 31
        %s252 = scalar_select %p251, %s248, 31
        %s253 = smul.addr %s250, 32
        %s254 = sadd.s32 %s252, %s253
        %s255 = smul.addr %s254, 8
        %s256 = scalar_lea.vmem %s1, %s255
        %s257 = smul.u32 32, %s22
        %s258 = smul.u32 32, %s22
        %p259 = scmp.lt.s32.totalorder %s21, 1
        %s260 = scalar_select %p259, %s21, 1
        %p261 = scmp.lt.s32.totalorder %s258, 31
        %s262 = scalar_select %p261, %s258, 31
        %s263 = smul.addr %s260, 32
        %s264 = sadd.s32 %s262, %s263
        %s265 = smul.addr %s264, 8
        %s266 = scalar_lea.vmem %s2, %s265
        %s267 = smul.u32 32, %s22
        %p268 = scmp.eq.s32.totalorder %s22, 0
        // Predicated region
        $region33: #{tpu_custom_call.1} parent=31 // pred_check
          %p269 = pneg %p268
        $region34: #{tpu_custom_call.1} parent=31 // pred_check_branch
          %271 = sbr.rel (%p269) target = $region36
        $region35: #{tpu_custom_call.1} parent=31 // pred_region
          %vm272 = vcmask 261120
          %273 = vst.msk [vmem:[#allocation2] sm:$0xff] %vm272, 0.0
          %274 = vst.msk [vmem:[#allocation2 + $0x8] sm:$0xff] %vm272, 0.0
          %275 = vst.msk [vmem:[#allocation2 + $0x10] sm:$0xff] %vm272, 0.0
          %276 = vst.msk [vmem:[#allocation2 + $0x18] sm:$0xff] %vm272, 0.0
          %277 = vst.msk [vmem:[#allocation2 + $0x20] sm:$0xff] %vm272, 0.0
          %278 = vst.msk [vmem:[#allocation2 + $0x28] sm:$0xff] %vm272, 0.0
          %279 = vst.msk [vmem:[#allocation2 + $0x30] sm:$0xff] %vm272, 0.0
          %280 = vst.msk [vmem:[#allocation2 + $0x38] sm:$0xff] %vm272, 0.0
          %281 = vst.msk [vmem:[#allocation2 + $0x40] sm:$0xff] %vm272, 0.0
          %282 = vst.msk [vmem:[#allocation2 + $0x48] sm:$0xff] %vm272, 0.0
          %283 = vst.msk [vmem:[#allocation2 + $0x50] sm:$0xff] %vm272, 0.0
          %284 = vst.msk [vmem:[#allocation2 + $0x58] sm:$0xff] %vm272, 0.0
          %285 = vst.msk [vmem:[#allocation2 + $0x60] sm:$0xff] %vm272, 0.0
          %286 = vst.msk [vmem:[#allocation2 + $0x68] sm:$0xff] %vm272, 0.0
          %287 = vst.msk [vmem:[#allocation2 + $0x70] sm:$0xff] %vm272, 0.0
          %288 = vst.msk [vmem:[#allocation2 + $0x78] sm:$0xff] %vm272, 0.0
          %289 = vst.msk [vmem:[#allocation2 + $0x80] sm:$0xff] %vm272, 0.0
          %290 = vst.msk [vmem:[#allocation2 + $0x88] sm:$0xff] %vm272, 0.0
          %291 = vst.msk [vmem:[#allocation2 + $0x90] sm:$0xff] %vm272, 0.0
          %292 = vst.msk [vmem:[#allocation2 + $0x98] sm:$0xff] %vm272, 0.0
          %293 = vst.msk [vmem:[#allocation2 + $0xa0] sm:$0xff] %vm272, 0.0
          %294 = vst.msk [vmem:[#allocation2 + $0xa8] sm:$0xff] %vm272, 0.0
          %295 = vst.msk [vmem:[#allocation2 + $0xb0] sm:$0xff] %vm272, 0.0
          %296 = vst.msk [vmem:[#allocation2 + $0xb8] sm:$0xff] %vm272, 0.0
          %297 = vst.msk [vmem:[#allocation2 + $0xc0] sm:$0xff] %vm272, 0.0
          %298 = vst.msk [vmem:[#allocation2 + $0xc8] sm:$0xff] %vm272, 0.0
          %299 = vst.msk [vmem:[#allocation2 + $0xd0] sm:$0xff] %vm272, 0.0
          %300 = vst.msk [vmem:[#allocation2 + $0xd8] sm:$0xff] %vm272, 0.0
          %301 = vst.msk [vmem:[#allocation2 + $0xe0] sm:$0xff] %vm272, 0.0
          %302 = vst.msk [vmem:[#allocation2 + $0xe8] sm:$0xff] %vm272, 0.0
          %303 = vst.msk [vmem:[#allocation2 + $0xf0] sm:$0xff] %vm272, 0.0
          %304 = vst.msk [vmem:[#allocation2 + $0xf8] sm:$0xff] %vm272, 0.0
          %305 = vst.msk [vmem:[#allocation3] sm:$0xff] %vm272, 0.0
          %306 = vst.msk [vmem:[#allocation3 + $0x8] sm:$0xff] %vm272, 0.0
          %307 = vst.msk [vmem:[#allocation3 + $0x10] sm:$0xff] %vm272, 0.0
          %308 = vst.msk [vmem:[#allocation3 + $0x18] sm:$0xff] %vm272, 0.0
          %309 = vst.msk [vmem:[#allocation3 + $0x20] sm:$0xff] %vm272, 0.0
          %310 = vst.msk [vmem:[#allocation3 + $0x28] sm:$0xff] %vm272, 0.0
          %311 = vst.msk [vmem:[#allocation3 + $0x30] sm:$0xff] %vm272, 0.0
          %312 = vst.msk [vmem:[#allocation3 + $0x38] sm:$0xff] %vm272, 0.0
          %313 = vst.msk [vmem:[#allocation3 + $0x40] sm:$0xff] %vm272, 0.0
          %314 = vst.msk [vmem:[#allocation3 + $0x48] sm:$0xff] %vm272, 0.0
          %315 = vst.msk [vmem:[#allocation3 + $0x50] sm:$0xff] %vm272, 0.0
          %316 = vst.msk [vmem:[#allocation3 + $0x58] sm:$0xff] %vm272, 0.0
          %317 = vst.msk [vmem:[#allocation3 + $0x60] sm:$0xff] %vm272, 0.0
          %318 = vst.msk [vmem:[#allocation3 + $0x68] sm:$0xff] %vm272, 0.0
          %319 = vst.msk [vmem:[#allocation3 + $0x70] sm:$0xff] %vm272, 0.0
          %320 = vst.msk [vmem:[#allocation3 + $0x78] sm:$0xff] %vm272, 0.0
          %321 = vst.msk [vmem:[#allocation3 + $0x80] sm:$0xff] %vm272, 0.0
          %322 = vst.msk [vmem:[#allocation3 + $0x88] sm:$0xff] %vm272, 0.0
          %323 = vst.msk [vmem:[#allocation3 + $0x90] sm:$0xff] %vm272, 0.0
          %324 = vst.msk [vmem:[#allocation3 + $0x98] sm:$0xff] %vm272, 0.0
          %325 = vst.msk [vmem:[#allocation3 + $0xa0] sm:$0xff] %vm272, 0.0
          %326 = vst.msk [vmem:[#allocation3 + $0xa8] sm:$0xff] %vm272, 0.0
          %327 = vst.msk [vmem:[#allocation3 + $0xb0] sm:$0xff] %vm272, 0.0
          %328 = vst.msk [vmem:[#allocation3 + $0xb8] sm:$0xff] %vm272, 0.0
          %329 = vst.msk [vmem:[#allocation3 + $0xc0] sm:$0xff] %vm272, 0.0
          %330 = vst.msk [vmem:[#allocation3 + $0xc8] sm:$0xff] %vm272, 0.0
          %331 = vst.msk [vmem:[#allocation3 + $0xd0] sm:$0xff] %vm272, 0.0
          %332 = vst.msk [vmem:[#allocation3 + $0xd8] sm:$0xff] %vm272, 0.0
          %333 = vst.msk [vmem:[#allocation3 + $0xe0] sm:$0xff] %vm272, 0.0
          %334 = vst.msk [vmem:[#allocation3 + $0xe8] sm:$0xff] %vm272, 0.0
          %335 = vst.msk [vmem:[#allocation3 + $0xf0] sm:$0xff] %vm272, 0.0
          %336 = vst.msk [vmem:[#allocation3 + $0xf8] sm:$0xff] %vm272, 0.0
        $region36: #{tpu_custom_call.1} parent=31 // pred_fallthru
          _
        %v337 = vld [vmem:[%s246] sm:$0xff]
        %v338 = vld [vmem:[%s246 + $0x8] sm:$0xff]
        %v339 = vld [vmem:[%s246 + $0x10] sm:$0xff]
        %v340 = vld [vmem:[%s246 + $0x18] sm:$0xff]
        %v341 = vld [vmem:[%s246 + $0x20] sm:$0xff]
        %v342 = vld [vmem:[%s246 + $0x28] sm:$0xff]
        %v343 = vld [vmem:[%s246 + $0x30] sm:$0xff]
        %v344 = vld [vmem:[%s246 + $0x38] sm:$0xff]
        %v345 = vld [vmem:[%s246 + $0x40] sm:$0xff]
        %v346 = vld [vmem:[%s246 + $0x48] sm:$0xff]
        %v347 = vld [vmem:[%s246 + $0x50] sm:$0xff]
        %v348 = vld [vmem:[%s246 + $0x58] sm:$0xff]
        %v349 = vld [vmem:[%s246 + $0x60] sm:$0xff]
        %v350 = vld [vmem:[%s246 + $0x68] sm:$0xff]
        %v351 = vld [vmem:[%s246 + $0x70] sm:$0xff]
        %v352 = vld [vmem:[%s246 + $0x78] sm:$0xff]
        %v353 = vld [vmem:[%s246 + $0x80] sm:$0xff]
        %v354 = vld [vmem:[%s246 + $0x88] sm:$0xff]
        %v355 = vld [vmem:[%s246 + $0x90] sm:$0xff]
        %v356 = vld [vmem:[%s246 + $0x98] sm:$0xff]
        %v357 = vld [vmem:[%s246 + $0xa0] sm:$0xff]
        %v358 = vld [vmem:[%s246 + $0xa8] sm:$0xff]
        %v359 = vld [vmem:[%s246 + $0xb0] sm:$0xff]
        %v360 = vld [vmem:[%s246 + $0xb8] sm:$0xff]
        %v361 = vld [vmem:[%s246 + $0xc0] sm:$0xff]
        %v362 = vld [vmem:[%s246 + $0xc8] sm:$0xff]
        %v363 = vld [vmem:[%s246 + $0xd0] sm:$0xff]
        %v364 = vld [vmem:[%s246 + $0xd8] sm:$0xff]
        %v365 = vld [vmem:[%s246 + $0xe0] sm:$0xff]
        %v366 = vld [vmem:[%s246 + $0xe8] sm:$0xff]
        %v367 = vld [vmem:[%s246 + $0xf0] sm:$0xff]
        %v368 = vld [vmem:[%s246 + $0xf8] sm:$0xff]
        %v369 = vld [vmem:[%s256] sm:$0xff]
        %v370 = vld [vmem:[%s256 + $0x8] sm:$0xff]
        %v371 = vld [vmem:[%s256 + $0x10] sm:$0xff]
        %v372 = vld [vmem:[%s256 + $0x18] sm:$0xff]
        %v373 = vld [vmem:[%s256 + $0x20] sm:$0xff]
        %v374 = vld [vmem:[%s256 + $0x28] sm:$0xff]
        %v375 = vld [vmem:[%s256 + $0x30] sm:$0xff]
        %v376 = vld [vmem:[%s256 + $0x38] sm:$0xff]
        %v377 = vld [vmem:[%s256 + $0x40] sm:$0xff]
        %v378 = vld [vmem:[%s256 + $0x48] sm:$0xff]
        %v379 = vld [vmem:[%s256 + $0x50] sm:$0xff]
        %v380 = vld [vmem:[%s256 + $0x58] sm:$0xff]
        %v381 = vld [vmem:[%s256 + $0x60] sm:$0xff]
        %v382 = vld [vmem:[%s256 + $0x68] sm:$0xff]
        %v383 = vld [vmem:[%s256 + $0x70] sm:$0xff]
        %v384 = vld [vmem:[%s256 + $0x78] sm:$0xff]
        %v385 = vld [vmem:[%s256 + $0x80] sm:$0xff]
        %v386 = vld [vmem:[%s256 + $0x88] sm:$0xff]
        %v387 = vld [vmem:[%s256 + $0x90] sm:$0xff]
        %v388 = vld [vmem:[%s256 + $0x98] sm:$0xff]
        %v389 = vld [vmem:[%s256 + $0xa0] sm:$0xff]
        %v390 = vld [vmem:[%s256 + $0xa8] sm:$0xff]
        %v391 = vld [vmem:[%s256 + $0xb0] sm:$0xff]
        %v392 = vld [vmem:[%s256 + $0xb8] sm:$0xff]
        %v393 = vld [vmem:[%s256 + $0xc0] sm:$0xff]
        %v394 = vld [vmem:[%s256 + $0xc8] sm:$0xff]
        %v395 = vld [vmem:[%s256 + $0xd0] sm:$0xff]
        %v396 = vld [vmem:[%s256 + $0xd8] sm:$0xff]
        %v397 = vld [vmem:[%s256 + $0xe0] sm:$0xff]
        %v398 = vld [vmem:[%s256 + $0xe8] sm:$0xff]
        %v399 = vld [vmem:[%s256 + $0xf0] sm:$0xff]
        %v400 = vld [vmem:[%s256 + $0xf8] sm:$0xff]
        %v401 = vld [vmem:[%s266] sm:$0xff]
        %v402 = vld [vmem:[%s266 + $0x8] sm:$0xff]
        %v403 = vld [vmem:[%s266 + $0x10] sm:$0xff]
        %v404 = vld [vmem:[%s266 + $0x18] sm:$0xff]
        %v405 = vld [vmem:[%s266 + $0x20] sm:$0xff]
        %v406 = vld [vmem:[%s266 + $0x28] sm:$0xff]
        %v407 = vld [vmem:[%s266 + $0x30] sm:$0xff]
        %v408 = vld [vmem:[%s266 + $0x38] sm:$0xff]
        %v409 = vld [vmem:[%s266 + $0x40] sm:$0xff]
        %v410 = vld [vmem:[%s266 + $0x48] sm:$0xff]
        %v411 = vld [vmem:[%s266 + $0x50] sm:$0xff]
        %v412 = vld [vmem:[%s266 + $0x58] sm:$0xff]
        %v413 = vld [vmem:[%s266 + $0x60] sm:$0xff]
        %v414 = vld [vmem:[%s266 + $0x68] sm:$0xff]
        %v415 = vld [vmem:[%s266 + $0x70] sm:$0xff]
        %v416 = vld [vmem:[%s266 + $0x78] sm:$0xff]
        %v417 = vld [vmem:[%s266 + $0x80] sm:$0xff]
        %v418 = vld [vmem:[%s266 + $0x88] sm:$0xff]
        %v419 = vld [vmem:[%s266 + $0x90] sm:$0xff]
        %v420 = vld [vmem:[%s266 + $0x98] sm:$0xff]
        %v421 = vld [vmem:[%s266 + $0xa0] sm:$0xff]
        %v422 = vld [vmem:[%s266 + $0xa8] sm:$0xff]
        %v423 = vld [vmem:[%s266 + $0xb0] sm:$0xff]
        %v424 = vld [vmem:[%s266 + $0xb8] sm:$0xff]
        %v425 = vld [vmem:[%s266 + $0xc0] sm:$0xff]
        %v426 = vld [vmem:[%s266 + $0xc8] sm:$0xff]
        %v427 = vld [vmem:[%s266 + $0xd0] sm:$0xff]
        %v428 = vld [vmem:[%s266 + $0xd8] sm:$0xff]
        %v429 = vld [vmem:[%s266 + $0xe0] sm:$0xff]
        %v430 = vld [vmem:[%s266 + $0xe8] sm:$0xff]
        %v431 = vld [vmem:[%s266 + $0xf0] sm:$0xff]
        %v432 = vld [vmem:[%s266 + $0xf8] sm:$0xff]
        %434 = vset.pattern.permute.xlu0 0
        %435 = vperm.xlu0 %434, %v401
        %v436 = vpop.permute.xlu0 %435
        %439 = vset.pattern.permute.xlu0 0
        %440 = vperm.xlu0 %439, %v402
        %v441 = vpop.permute.xlu0 %440
        %444 = vset.pattern.permute.xlu0 0
        %445 = vperm.xlu0 %444, %v403
        %v446 = vpop.permute.xlu0 %445
        %449 = vset.pattern.permute.xlu0 0
        %450 = vperm.xlu0 %449, %v404
        %v451 = vpop.permute.xlu0 %450
        %454 = vset.pattern.permute.xlu0 0
        %455 = vperm.xlu0 %454, %v405
        %v456 = vpop.permute.xlu0 %455
        %459 = vset.pattern.permute.xlu0 0
        %460 = vperm.xlu0 %459, %v406
        %v461 = vpop.permute.xlu0 %460
        %464 = vset.pattern.permute.xlu0 0
        %465 = vperm.xlu0 %464, %v407
        %v466 = vpop.permute.xlu0 %465
        %469 = vset.pattern.permute.xlu0 0
        %470 = vperm.xlu0 %469, %v408
        %v471 = vpop.permute.xlu0 %470
        %474 = vset.pattern.permute.xlu0 0
        %475 = vperm.xlu0 %474, %v409
        %v476 = vpop.permute.xlu0 %475
        %479 = vset.pattern.permute.xlu0 0
        %480 = vperm.xlu0 %479, %v410
        %v481 = vpop.permute.xlu0 %480
        %484 = vset.pattern.permute.xlu0 0
        %485 = vperm.xlu0 %484, %v411
        %v486 = vpop.permute.xlu0 %485
        %489 = vset.pattern.permute.xlu0 0
        %490 = vperm.xlu0 %489, %v412
        %v491 = vpop.permute.xlu0 %490
        %494 = vset.pattern.permute.xlu0 0
        %495 = vperm.xlu0 %494, %v413
        %v496 = vpop.permute.xlu0 %495
        %499 = vset.pattern.permute.xlu0 0
        %500 = vperm.xlu0 %499, %v414
        %v501 = vpop.permute.xlu0 %500
        %504 = vset.pattern.permute.xlu0 0
        %505 = vperm.xlu0 %504, %v415
        %v506 = vpop.permute.xlu0 %505
        %509 = vset.pattern.permute.xlu0 0
        %510 = vperm.xlu0 %509, %v416
        %v511 = vpop.permute.xlu0 %510
        %514 = vset.pattern.permute.xlu0 0
        %515 = vperm.xlu0 %514, %v417
        %v516 = vpop.permute.xlu0 %515
        %519 = vset.pattern.permute.xlu0 0
        %520 = vperm.xlu0 %519, %v418
        %v521 = vpop.permute.xlu0 %520
        %524 = vset.pattern.permute.xlu0 0
        %525 = vperm.xlu0 %524, %v419
        %v526 = vpop.permute.xlu0 %525
        %529 = vset.pattern.permute.xlu0 0
        %530 = vperm.xlu0 %529, %v420
        %v531 = vpop.permute.xlu0 %530
        %534 = vset.pattern.permute.xlu0 0
        %535 = vperm.xlu0 %534, %v421
        %v536 = vpop.permute.xlu0 %535
        %539 = vset.pattern.permute.xlu0 0
        %540 = vperm.xlu0 %539, %v422
        %v541 = vpop.permute.xlu0 %540
        %544 = vset.pattern.permute.xlu0 0
        %545 = vperm.xlu0 %544, %v423
        %v546 = vpop.permute.xlu0 %545
        %549 = vset.pattern.permute.xlu0 0
        %550 = vperm.xlu0 %549, %v424
        %v551 = vpop.permute.xlu0 %550
        %554 = vset.pattern.permute.xlu0 0
        %555 = vperm.xlu0 %554, %v425
        %v556 = vpop.permute.xlu0 %555
        %559 = vset.pattern.permute.xlu0 0
        %560 = vperm.xlu0 %559, %v426
        %v561 = vpop.permute.xlu0 %560
        %564 = vset.pattern.permute.xlu0 0
        %565 = vperm.xlu0 %564, %v427
        %v566 = vpop.permute.xlu0 %565
        %569 = vset.pattern.permute.xlu0 0
        %570 = vperm.xlu0 %569, %v428
        %v571 = vpop.permute.xlu0 %570
        %574 = vset.pattern.permute.xlu0 0
        %575 = vperm.xlu0 %574, %v429
        %v576 = vpop.permute.xlu0 %575
        %579 = vset.pattern.permute.xlu0 0
        %580 = vperm.xlu0 %579, %v430
        %v581 = vpop.permute.xlu0 %580
        %584 = vset.pattern.permute.xlu0 0
        %585 = vperm.xlu0 %584, %v431
        %v586 = vpop.permute.xlu0 %585
        %589 = vset.pattern.permute.xlu0 0
        %590 = vperm.xlu0 %589, %v432
        %v591 = vpop.permute.xlu0 %590
        %v593 = vmul.f32 %v337, %v436
        %v594 = vmul.f32 %v338, %v441
        %v595 = vmul.f32 %v339, %v446
        %v596 = vmul.f32 %v340, %v451
        %v597 = vmul.f32 %v341, %v456
        %v598 = vmul.f32 %v342, %v461
        %v599 = vmul.f32 %v343, %v466
        %v600 = vmul.f32 %v344, %v471
        %v601 = vmul.f32 %v345, %v476
        %v602 = vmul.f32 %v346, %v481
        %v603 = vmul.f32 %v347, %v486
        %v604 = vmul.f32 %v348, %v491
        %v605 = vmul.f32 %v349, %v496
        %v606 = vmul.f32 %v350, %v501
        %v607 = vmul.f32 %v351, %v506
        %v608 = vmul.f32 %v352, %v511
        %v609 = vmul.f32 %v353, %v516
        %v610 = vmul.f32 %v354, %v521
        %v611 = vmul.f32 %v355, %v526
        %v612 = vmul.f32 %v356, %v531
        %v613 = vmul.f32 %v357, %v536
        %v614 = vmul.f32 %v358, %v541
        %v615 = vmul.f32 %v359, %v546
        %v616 = vmul.f32 %v360, %v551
        %v617 = vmul.f32 %v361, %v556
        %v618 = vmul.f32 %v362, %v561
        %v619 = vmul.f32 %v363, %v566
        %v620 = vmul.f32 %v364, %v571
        %v621 = vmul.f32 %v365, %v576
        %v622 = vmul.f32 %v366, %v581
        %v623 = vmul.f32 %v367, %v586
        %v624 = vmul.f32 %v368, %v591
        %v625 = vmul.f32 %v369, %v436
        %v626 = vmul.f32 %v370, %v441
        %v627 = vmul.f32 %v371, %v446
        %v628 = vmul.f32 %v372, %v451
        %v629 = vmul.f32 %v373, %v456
        %v630 = vmul.f32 %v374, %v461
        %v631 = vmul.f32 %v375, %v466
        %v632 = vmul.f32 %v376, %v471
        %v633 = vmul.f32 %v377, %v476
        %v634 = vmul.f32 %v378, %v481
        %v635 = vmul.f32 %v379, %v486
        %v636 = vmul.f32 %v380, %v491
        %v637 = vmul.f32 %v381, %v496
        %v638 = vmul.f32 %v382, %v501
        %v639 = vmul.f32 %v383, %v506
        %v640 = vmul.f32 %v384, %v511
        %v641 = vmul.f32 %v385, %v516
        %v642 = vmul.f32 %v386, %v521
        %v643 = vmul.f32 %v387, %v526
        %v644 = vmul.f32 %v388, %v531
        %v645 = vmul.f32 %v389, %v536
        %v646 = vmul.f32 %v390, %v541
        %v647 = vmul.f32 %v391, %v546
        %v648 = vmul.f32 %v392, %v551
        %v649 = vmul.f32 %v393, %v556
        %v650 = vmul.f32 %v394, %v561
        %v651 = vmul.f32 %v395, %v566
        %v652 = vmul.f32 %v396, %v571
        %v653 = vmul.f32 %v397, %v576
        %v654 = vmul.f32 %v398, %v581
        %v655 = vmul.f32 %v399, %v586
        %v656 = vmul.f32 %v400, %v591
        %v657 = vld [vmem:[#allocation2] sm:$0xff]
        %v658 = vld [vmem:[#allocation2 + $0x8] sm:$0xff]
        %v659 = vld [vmem:[#allocation2 + $0x10] sm:$0xff]
        %v660 = vld [vmem:[#allocation2 + $0x18] sm:$0xff]
        %v661 = vld [vmem:[#allocation2 + $0x20] sm:$0xff]
        %v662 = vld [vmem:[#allocation2 + $0x28] sm:$0xff]
        %v663 = vld [vmem:[#allocation2 + $0x30] sm:$0xff]
        %v664 = vld [vmem:[#allocation2 + $0x38] sm:$0xff]
        %v665 = vld [vmem:[#allocation2 + $0x40] sm:$0xff]
        %v666 = vld [vmem:[#allocation2 + $0x48] sm:$0xff]
        %v667 = vld [vmem:[#allocation2 + $0x50] sm:$0xff]
        %v668 = vld [vmem:[#allocation2 + $0x58] sm:$0xff]
        %v669 = vld [vmem:[#allocation2 + $0x60] sm:$0xff]
        %v670 = vld [vmem:[#allocation2 + $0x68] sm:$0xff]
        %v671 = vld [vmem:[#allocation2 + $0x70] sm:$0xff]
        %v672 = vld [vmem:[#allocation2 + $0x78] sm:$0xff]
        %v673 = vld [vmem:[#allocation2 + $0x80] sm:$0xff]
        %v674 = vld [vmem:[#allocation2 + $0x88] sm:$0xff]
        %v675 = vld [vmem:[#allocation2 + $0x90] sm:$0xff]
        %v676 = vld [vmem:[#allocation2 + $0x98] sm:$0xff]
        %v677 = vld [vmem:[#allocation2 + $0xa0] sm:$0xff]
        %v678 = vld [vmem:[#allocation2 + $0xa8] sm:$0xff]
        %v679 = vld [vmem:[#allocation2 + $0xb0] sm:$0xff]
        %v680 = vld [vmem:[#allocation2 + $0xb8] sm:$0xff]
        %v681 = vld [vmem:[#allocation2 + $0xc0] sm:$0xff]
        %v682 = vld [vmem:[#allocation2 + $0xc8] sm:$0xff]
        %v683 = vld [vmem:[#allocation2 + $0xd0] sm:$0xff]
        %v684 = vld [vmem:[#allocation2 + $0xd8] sm:$0xff]
        %v685 = vld [vmem:[#allocation2 + $0xe0] sm:$0xff]
        %v686 = vld [vmem:[#allocation2 + $0xe8] sm:$0xff]
        %v687 = vld [vmem:[#allocation2 + $0xf0] sm:$0xff]
        %v688 = vld [vmem:[#allocation2 + $0xf8] sm:$0xff]
        %v689 = vmul.f32 %v593, %v369
        %v690 = vmul.f32 %v594, %v370
        %v691 = vmul.f32 %v595, %v371
        %v692 = vmul.f32 %v596, %v372
        %v693 = vmul.f32 %v597, %v373
        %v694 = vmul.f32 %v598, %v374
        %v695 = vmul.f32 %v599, %v375
        %v696 = vmul.f32 %v600, %v376
        %v697 = vmul.f32 %v601, %v377
        %v698 = vmul.f32 %v602, %v378
        %v699 = vmul.f32 %v603, %v379
        %v700 = vmul.f32 %v604, %v380
        %v701 = vmul.f32 %v605, %v381
        %v702 = vmul.f32 %v606, %v382
        %v703 = vmul.f32 %v607, %v383
        %v704 = vmul.f32 %v608, %v384
        %v705 = vmul.f32 %v609, %v385
        %v706 = vmul.f32 %v610, %v386
        %v707 = vmul.f32 %v611, %v387
        %v708 = vmul.f32 %v612, %v388
        %v709 = vmul.f32 %v613, %v389
        %v710 = vmul.f32 %v614, %v390
        %v711 = vmul.f32 %v615, %v391
        %v712 = vmul.f32 %v616, %v392
        %v713 = vmul.f32 %v617, %v393
        %v714 = vmul.f32 %v618, %v394
        %v715 = vmul.f32 %v619, %v395
        %v716 = vmul.f32 %v620, %v396
        %v717 = vmul.f32 %v621, %v397
        %v718 = vmul.f32 %v622, %v398
        %v719 = vmul.f32 %v623, %v399
        %v720 = vmul.f32 %v624, %v400
        %v721 = vadd.f32 %v657, %v689
        %v722 = vadd.f32 %v658, %v690
        %v723 = vadd.f32 %v659, %v691
        %v724 = vadd.f32 %v660, %v692
        %v725 = vadd.f32 %v661, %v693
        %v726 = vadd.f32 %v662, %v694
        %v727 = vadd.f32 %v663, %v695
        %v728 = vadd.f32 %v664, %v696
        %v729 = vadd.f32 %v665, %v697
        %v730 = vadd.f32 %v666, %v698
        %v731 = vadd.f32 %v667, %v699
        %v732 = vadd.f32 %v668, %v700
        %v733 = vadd.f32 %v669, %v701
        %v734 = vadd.f32 %v670, %v702
        %v735 = vadd.f32 %v671, %v703
        %v736 = vadd.f32 %v672, %v704
        %v737 = vadd.f32 %v673, %v705
        %v738 = vadd.f32 %v674, %v706
        %v739 = vadd.f32 %v675, %v707
        %v740 = vadd.f32 %v676, %v708
        %v741 = vadd.f32 %v677, %v709
        %v742 = vadd.f32 %v678, %v710
        %v743 = vadd.f32 %v679, %v711
        %v744 = vadd.f32 %v680, %v712
        %v745 = vadd.f32 %v681, %v713
        %v746 = vadd.f32 %v682, %v714
        %v747 = vadd.f32 %v683, %v715
        %v748 = vadd.f32 %v684, %v716
        %v749 = vadd.f32 %v685, %v717
        %v750 = vadd.f32 %v686, %v718
        %v751 = vadd.f32 %v687, %v719
        %v752 = vadd.f32 %v688, %v720
        %vm753 = vcmask 261120
        %754 = vst.msk [vmem:[#allocation2] sm:$0xff] %vm753, %v721
        %755 = vst.msk [vmem:[#allocation2 + $0x8] sm:$0xff] %vm753, %v722
        %756 = vst.msk [vmem:[#allocation2 + $0x10] sm:$0xff] %vm753, %v723
        %757 = vst.msk [vmem:[#allocation2 + $0x18] sm:$0xff] %vm753, %v724
        %758 = vst.msk [vmem:[#allocation2 + $0x20] sm:$0xff] %vm753, %v725
        %759 = vst.msk [vmem:[#allocation2 + $0x28] sm:$0xff] %vm753, %v726
        %760 = vst.msk [vmem:[#allocation2 + $0x30] sm:$0xff] %vm753, %v727
        %761 = vst.msk [vmem:[#allocation2 + $0x38] sm:$0xff] %vm753, %v728
        %762 = vst.msk [vmem:[#allocation2 + $0x40] sm:$0xff] %vm753, %v729
        %763 = vst.msk [vmem:[#allocation2 + $0x48] sm:$0xff] %vm753, %v730
        %764 = vst.msk [vmem:[#allocation2 + $0x50] sm:$0xff] %vm753, %v731
        %765 = vst.msk [vmem:[#allocation2 + $0x58] sm:$0xff] %vm753, %v732
        %766 = vst.msk [vmem:[#allocation2 + $0x60] sm:$0xff] %vm753, %v733
        %767 = vst.msk [vmem:[#allocation2 + $0x68] sm:$0xff] %vm753, %v734
        %768 = vst.msk [vmem:[#allocation2 + $0x70] sm:$0xff] %vm753, %v735
        %769 = vst.msk [vmem:[#allocation2 + $0x78] sm:$0xff] %vm753, %v736
        %770 = vst.msk [vmem:[#allocation2 + $0x80] sm:$0xff] %vm753, %v737
        %771 = vst.msk [vmem:[#allocation2 + $0x88] sm:$0xff] %vm753, %v738
        %772 = vst.msk [vmem:[#allocation2 + $0x90] sm:$0xff] %vm753, %v739
        %773 = vst.msk [vmem:[#allocation2 + $0x98] sm:$0xff] %vm753, %v740
        %774 = vst.msk [vmem:[#allocation2 + $0xa0] sm:$0xff] %vm753, %v741
        %775 = vst.msk [vmem:[#allocation2 + $0xa8] sm:$0xff] %vm753, %v742
        %776 = vst.msk [vmem:[#allocation2 + $0xb0] sm:$0xff] %vm753, %v743
        %777 = vst.msk [vmem:[#allocation2 + $0xb8] sm:$0xff] %vm753, %v744
        %778 = vst.msk [vmem:[#allocation2 + $0xc0] sm:$0xff] %vm753, %v745
        %779 = vst.msk [vmem:[#allocation2 + $0xc8] sm:$0xff] %vm753, %v746
        %780 = vst.msk [vmem:[#allocation2 + $0xd0] sm:$0xff] %vm753, %v747
        %781 = vst.msk [vmem:[#allocation2 + $0xd8] sm:$0xff] %vm753, %v748
        %782 = vst.msk [vmem:[#allocation2 + $0xe0] sm:$0xff] %vm753, %v749
        %783 = vst.msk [vmem:[#allocation2 + $0xe8] sm:$0xff] %vm753, %v750
        %784 = vst.msk [vmem:[#allocation2 + $0xf0] sm:$0xff] %vm753, %v751
        %785 = vst.msk [vmem:[#allocation2 + $0xf8] sm:$0xff] %vm753, %v752
        %v786 = vld [vmem:[#allocation3] sm:$0xff]
        %v787 = vld [vmem:[#allocation3 + $0x8] sm:$0xff]
        %v788 = vld [vmem:[#allocation3 + $0x10] sm:$0xff]
        %v789 = vld [vmem:[#allocation3 + $0x18] sm:$0xff]
        %v790 = vld [vmem:[#allocation3 + $0x20] sm:$0xff]
        %v791 = vld [vmem:[#allocation3 + $0x28] sm:$0xff]
        %v792 = vld [vmem:[#allocation3 + $0x30] sm:$0xff]
        %v793 = vld [vmem:[#allocation3 + $0x38] sm:$0xff]
        %v794 = vld [vmem:[#allocation3 + $0x40] sm:$0xff]
        %v795 = vld [vmem:[#allocation3 + $0x48] sm:$0xff]
        %v796 = vld [vmem:[#allocation3 + $0x50] sm:$0xff]
        %v797 = vld [vmem:[#allocation3 + $0x58] sm:$0xff]
        %v798 = vld [vmem:[#allocation3 + $0x60] sm:$0xff]
        %v799 = vld [vmem:[#allocation3 + $0x68] sm:$0xff]
        %v800 = vld [vmem:[#allocation3 + $0x70] sm:$0xff]
        %v801 = vld [vmem:[#allocation3 + $0x78] sm:$0xff]
        %v802 = vld [vmem:[#allocation3 + $0x80] sm:$0xff]
        %v803 = vld [vmem:[#allocation3 + $0x88] sm:$0xff]
        %v804 = vld [vmem:[#allocation3 + $0x90] sm:$0xff]
        %v805 = vld [vmem:[#allocation3 + $0x98] sm:$0xff]
        %v806 = vld [vmem:[#allocation3 + $0xa0] sm:$0xff]
        %v807 = vld [vmem:[#allocation3 + $0xa8] sm:$0xff]
        %v808 = vld [vmem:[#allocation3 + $0xb0] sm:$0xff]
        %v809 = vld [vmem:[#allocation3 + $0xb8] sm:$0xff]
        %v810 = vld [vmem:[#allocation3 + $0xc0] sm:$0xff]
        %v811 = vld [vmem:[#allocation3 + $0xc8] sm:$0xff]
        %v812 = vld [vmem:[#allocation3 + $0xd0] sm:$0xff]
        %v813 = vld [vmem:[#allocation3 + $0xd8] sm:$0xff]
        %v814 = vld [vmem:[#allocation3 + $0xe0] sm:$0xff]
        %v815 = vld [vmem:[#allocation3 + $0xe8] sm:$0xff]
        %v816 = vld [vmem:[#allocation3 + $0xf0] sm:$0xff]
        %v817 = vld [vmem:[#allocation3 + $0xf8] sm:$0xff]
        %v818 = vadd.f32 %v593, %v625
        %v819 = vadd.f32 %v594, %v626
        %v820 = vadd.f32 %v595, %v627
        %v821 = vadd.f32 %v596, %v628
        %v822 = vadd.f32 %v597, %v629
        %v823 = vadd.f32 %v598, %v630
        %v824 = vadd.f32 %v599, %v631
        %v825 = vadd.f32 %v600, %v632
        %v826 = vadd.f32 %v601, %v633
        %v827 = vadd.f32 %v602, %v634
        %v828 = vadd.f32 %v603, %v635
        %v829 = vadd.f32 %v604, %v636
        %v830 = vadd.f32 %v605, %v637
        %v831 = vadd.f32 %v606, %v638
        %v832 = vadd.f32 %v607, %v639
        %v833 = vadd.f32 %v608, %v640
        %v834 = vadd.f32 %v609, %v641
        %v835 = vadd.f32 %v610, %v642
        %v836 = vadd.f32 %v611, %v643
        %v837 = vadd.f32 %v612, %v644
        %v838 = vadd.f32 %v613, %v645
        %v839 = vadd.f32 %v614, %v646
        %v840 = vadd.f32 %v615, %v647
        %v841 = vadd.f32 %v616, %v648
        %v842 = vadd.f32 %v617, %v649
        %v843 = vadd.f32 %v618, %v650
        %v844 = vadd.f32 %v619, %v651
        %v845 = vadd.f32 %v620, %v652
        %v846 = vadd.f32 %v621, %v653
        %v847 = vadd.f32 %v622, %v654
        %v848 = vadd.f32 %v623, %v655
        %v849 = vadd.f32 %v624, %v656
        %v850 = vadd.f32 %v786, %v818
        %v851 = vadd.f32 %v787, %v819
        %v852 = vadd.f32 %v788, %v820
        %v853 = vadd.f32 %v789, %v821
        %v854 = vadd.f32 %v790, %v822
        %v855 = vadd.f32 %v791, %v823
        %v856 = vadd.f32 %v792, %v824
        %v857 = vadd.f32 %v793, %v825
        %v858 = vadd.f32 %v794, %v826
        %v859 = vadd.f32 %v795, %v827
        %v860 = vadd.f32 %v796, %v828
        %v861 = vadd.f32 %v797, %v829
        %v862 = vadd.f32 %v798, %v830
        %v863 = vadd.f32 %v799, %v831
        %v864 = vadd.f32 %v800, %v832
        %v865 = vadd.f32 %v801, %v833
        %v866 = vadd.f32 %v802, %v834
        %v867 = vadd.f32 %v803, %v835
        %v868 = vadd.f32 %v804, %v836
        %v869 = vadd.f32 %v805, %v837
        %v870 = vadd.f32 %v806, %v838
        %v871 = vadd.f32 %v807, %v839
        %v872 = vadd.f32 %v808, %v840
        %v873 = vadd.f32 %v809, %v841
        %v874 = vadd.f32 %v810, %v842
        %v875 = vadd.f32 %v811, %v843
        %v876 = vadd.f32 %v812, %v844
        %v877 = vadd.f32 %v813, %v845
        %v878 = vadd.f32 %v814, %v846
        %v879 = vadd.f32 %v815, %v847
        %v880 = vadd.f32 %v816, %v848
        %v881 = vadd.f32 %v817, %v849
        %882 = vst.msk [vmem:[#allocation3] sm:$0xff] %vm753, %v850
        %883 = vst.msk [vmem:[#allocation3 + $0x8] sm:$0xff] %vm753, %v851
        %884 = vst.msk [vmem:[#allocation3 + $0x10] sm:$0xff] %vm753, %v852
        %885 = vst.msk [vmem:[#allocation3 + $0x18] sm:$0xff] %vm753, %v853
        %886 = vst.msk [vmem:[#allocation3 + $0x20] sm:$0xff] %vm753, %v854
        %887 = vst.msk [vmem:[#allocation3 + $0x28] sm:$0xff] %vm753, %v855
        %888 = vst.msk [vmem:[#allocation3 + $0x30] sm:$0xff] %vm753, %v856
        %889 = vst.msk [vmem:[#allocation3 + $0x38] sm:$0xff] %vm753, %v857
        %890 = vst.msk [vmem:[#allocation3 + $0x40] sm:$0xff] %vm753, %v858
        %891 = vst.msk [vmem:[#allocation3 + $0x48] sm:$0xff] %vm753, %v859
        %892 = vst.msk [vmem:[#allocation3 + $0x50] sm:$0xff] %vm753, %v860
        %893 = vst.msk [vmem:[#allocation3 + $0x58] sm:$0xff] %vm753, %v861
        %894 = vst.msk [vmem:[#allocation3 + $0x60] sm:$0xff] %vm753, %v862
        %895 = vst.msk [vmem:[#allocation3 + $0x68] sm:$0xff] %vm753, %v863
        %896 = vst.msk [vmem:[#allocation3 + $0x70] sm:$0xff] %vm753, %v864
        %897 = vst.msk [vmem:[#allocation3 + $0x78] sm:$0xff] %vm753, %v865
        %898 = vst.msk [vmem:[#allocation3 + $0x80] sm:$0xff] %vm753, %v866
        %899 = vst.msk [vmem:[#allocation3 + $0x88] sm:$0xff] %vm753, %v867
        %900 = vst.msk [vmem:[#allocation3 + $0x90] sm:$0xff] %vm753, %v868
        %901 = vst.msk [vmem:[#allocation3 + $0x98] sm:$0xff] %vm753, %v869
        %902 = vst.msk [vmem:[#allocation3 + $0xa0] sm:$0xff] %vm753, %v870
        %903 = vst.msk [vmem:[#allocation3 + $0xa8] sm:$0xff] %vm753, %v871
        %904 = vst.msk [vmem:[#allocation3 + $0xb0] sm:$0xff] %vm753, %v872
        %905 = vst.msk [vmem:[#allocation3 + $0xb8] sm:$0xff] %vm753, %v873
        %906 = vst.msk [vmem:[#allocation3 + $0xc0] sm:$0xff] %vm753, %v874
        %907 = vst.msk [vmem:[#allocation3 + $0xc8] sm:$0xff] %vm753, %v875
        %908 = vst.msk [vmem:[#allocation3 + $0xd0] sm:$0xff] %vm753, %v876
        %909 = vst.msk [vmem:[#allocation3 + $0xd8] sm:$0xff] %vm753, %v877
        %910 = vst.msk [vmem:[#allocation3 + $0xe0] sm:$0xff] %vm753, %v878
        %911 = vst.msk [vmem:[#allocation3 + $0xe8] sm:$0xff] %vm753, %v879
        %912 = vst.msk [vmem:[#allocation3 + $0xf0] sm:$0xff] %vm753, %v880
        %913 = vst.msk [vmem:[#allocation3 + $0xf8] sm:$0xff] %vm753, %v881
        // Predicated region
        $region37: #{tpu_custom_call.1} parent=31 // pred_check
          %p914 = pneg %p268
        $region38: #{tpu_custom_call.1} parent=31 // pred_check_branch
          %916 = sbr.rel (%p914) target = $region40
        $region39: #{tpu_custom_call.1} parent=31 // pred_region
          %v917 = vld [vmem:[#allocation2] sm:$0xff]
          %v918 = vld [vmem:[#allocation2 + $0x8] sm:$0xff]
          %v919 = vld [vmem:[#allocation2 + $0x10] sm:$0xff]
          %v920 = vld [vmem:[#allocation2 + $0x18] sm:$0xff]
          %v921 = vld [vmem:[#allocation2 + $0x20] sm:$0xff]
          %v922 = vld [vmem:[#allocation2 + $0x28] sm:$0xff]
          %v923 = vld [vmem:[#allocation2 + $0x30] sm:$0xff]
          %v924 = vld [vmem:[#allocation2 + $0x38] sm:$0xff]
          %v925 = vld [vmem:[#allocation2 + $0x40] sm:$0xff]
          %v926 = vld [vmem:[#allocation2 + $0x48] sm:$0xff]
          %v927 = vld [vmem:[#allocation2 + $0x50] sm:$0xff]
          %v928 = vld [vmem:[#allocation2 + $0x58] sm:$0xff]
          %v929 = vld [vmem:[#allocation2 + $0x60] sm:$0xff]
          %v930 = vld [vmem:[#allocation2 + $0x68] sm:$0xff]
          %v931 = vld [vmem:[#allocation2 + $0x70] sm:$0xff]
          %v932 = vld [vmem:[#allocation2 + $0x78] sm:$0xff]
          %v933 = vld [vmem:[#allocation2 + $0x80] sm:$0xff]
          %v934 = vld [vmem:[#allocation2 + $0x88] sm:$0xff]
          %v935 = vld [vmem:[#allocation2 + $0x90] sm:$0xff]
          %v936 = vld [vmem:[#allocation2 + $0x98] sm:$0xff]
          %v937 = vld [vmem:[#allocation2 + $0xa0] sm:$0xff]
          %v938 = vld [vmem:[#allocation2 + $0xa8] sm:$0xff]
          %v939 = vld [vmem:[#allocation2 + $0xb0] sm:$0xff]
          %v940 = vld [vmem:[#allocation2 + $0xb8] sm:$0xff]
          %v941 = vld [vmem:[#allocation2 + $0xc0] sm:$0xff]
          %v942 = vld [vmem:[#allocation2 + $0xc8] sm:$0xff]
          %v943 = vld [vmem:[#allocation2 + $0xd0] sm:$0xff]
          %v944 = vld [vmem:[#allocation2 + $0xd8] sm:$0xff]
          %v945 = vld [vmem:[#allocation2 + $0xe0] sm:$0xff]
          %v946 = vld [vmem:[#allocation2 + $0xe8] sm:$0xff]
          %v947 = vld [vmem:[#allocation2 + $0xf0] sm:$0xff]
          %v948 = vld [vmem:[#allocation2 + $0xf8] sm:$0xff]
          %v949 = vsel %vm753, %v917, 0.0
          %v950 = vsel %vm753, %v918, 0.0
          %v951 = vadd.f32 %v949, %v950
          %v952 = vsel %vm753, %v919, 0.0
          %v953 = vadd.f32 %v951, %v952
          %v954 = vsel %vm753, %v920, 0.0
          %v955 = vadd.f32 %v953, %v954
          %v956 = vsel %vm753, %v921, 0.0
          %v957 = vadd.f32 %v955, %v956
          %v958 = vsel %vm753, %v922, 0.0
          %v959 = vadd.f32 %v957, %v958
          %v960 = vsel %vm753, %v923, 0.0
          %v961 = vadd.f32 %v959, %v960
          %v962 = vsel %vm753, %v924, 0.0
          %v963 = vadd.f32 %v961, %v962
          %v964 = vsel %vm753, %v925, 0.0
          %v965 = vadd.f32 %v963, %v964
          %v966 = vsel %vm753, %v926, 0.0
          %v967 = vadd.f32 %v965, %v966
          %v968 = vsel %vm753, %v927, 0.0
          %v969 = vadd.f32 %v967, %v968
          %v970 = vsel %vm753, %v928, 0.0
          %v971 = vadd.f32 %v969, %v970
          %v972 = vsel %vm753, %v929, 0.0
          %v973 = vadd.f32 %v971, %v972
          %v974 = vsel %vm753, %v930, 0.0
          %v975 = vadd.f32 %v973, %v974
          %v976 = vsel %vm753, %v931, 0.0
          %v977 = vadd.f32 %v975, %v976
          %v978 = vsel %vm753, %v932, 0.0
          %v979 = vadd.f32 %v977, %v978
          %v980 = vsel %vm753, %v933, 0.0
          %v981 = vadd.f32 %v979, %v980
          %v982 = vsel %vm753, %v934, 0.0
          %v983 = vadd.f32 %v981, %v982
          %v984 = vsel %vm753, %v935, 0.0
          %v985 = vadd.f32 %v983, %v984
          %v986 = vsel %vm753, %v936, 0.0
          %v987 = vadd.f32 %v985, %v986
          %v988 = vsel %vm753, %v937, 0.0
          %v989 = vadd.f32 %v987, %v988
          %v990 = vsel %vm753, %v938, 0.0
          %v991 = vadd.f32 %v989, %v990
          %v992 = vsel %vm753, %v939, 0.0
          %v993 = vadd.f32 %v991, %v992
          %v994 = vsel %vm753, %v940, 0.0
          %v995 = vadd.f32 %v993, %v994
          %v996 = vsel %vm753, %v941, 0.0
          %v997 = vadd.f32 %v995, %v996
          %v998 = vsel %vm753, %v942, 0.0
          %v999 = vadd.f32 %v997, %v998
          %v1000 = vsel %vm753, %v943, 0.0
          %v1001 = vadd.f32 %v999, %v1000
          %v1002 = vsel %vm753, %v944, 0.0
          %v1003 = vadd.f32 %v1001, %v1002
          %v1004 = vsel %vm753, %v945, 0.0
          %v1005 = vadd.f32 %v1003, %v1004
          %v1006 = vsel %vm753, %v946, 0.0
          %v1007 = vadd.f32 %v1005, %v1006
          %v1008 = vsel %vm753, %v947, 0.0
          %v1009 = vadd.f32 %v1007, %v1008
          %v1010 = vsel %vm753, %v948, 0.0
          %v1011 = vadd.f32 %v1009, %v1010
          %v1012 = vrot.slane %v1011, 4
          %v1013 = vadd.f32 %v1011, %v1012
          %v1014 = vrot.slane %v1013, 2
          %v1015 = vadd.f32 %v1013, %v1014
          %v1016 = vrot.slane %v1015, 1
          %v1017 = vadd.f32 %v1015, %v1016
          %v1018 = vmul.f32 %v1017, 2.0
          %v1019 = vld [vmem:[#allocation3] sm:$0xff]
          %v1020 = vld [vmem:[#allocation3 + $0x8] sm:$0xff]
          %v1021 = vld [vmem:[#allocation3 + $0x10] sm:$0xff]
          %v1022 = vld [vmem:[#allocation3 + $0x18] sm:$0xff]
          %v1023 = vld [vmem:[#allocation3 + $0x20] sm:$0xff]
          %v1024 = vld [vmem:[#allocation3 + $0x28] sm:$0xff]
          %v1025 = vld [vmem:[#allocation3 + $0x30] sm:$0xff]
          %v1026 = vld [vmem:[#allocation3 + $0x38] sm:$0xff]
          %v1027 = vld [vmem:[#allocation3 + $0x40] sm:$0xff]
          %v1028 = vld [vmem:[#allocation3 + $0x48] sm:$0xff]
          %v1029 = vld [vmem:[#allocation3 + $0x50] sm:$0xff]
          %v1030 = vld [vmem:[#allocation3 + $0x58] sm:$0xff]
          %v1031 = vld [vmem:[#allocation3 + $0x60] sm:$0xff]
          %v1032 = vld [vmem:[#allocation3 + $0x68] sm:$0xff]
          %v1033 = vld [vmem:[#allocation3 + $0x70] sm:$0xff]
          %v1034 = vld [vmem:[#allocation3 + $0x78] sm:$0xff]
          %v1035 = vld [vmem:[#allocation3 + $0x80] sm:$0xff]
          %v1036 = vld [vmem:[#allocation3 + $0x88] sm:$0xff]
          %v1037 = vld [vmem:[#allocation3 + $0x90] sm:$0xff]
          %v1038 = vld [vmem:[#allocation3 + $0x98] sm:$0xff]
          %v1039 = vld [vmem:[#allocation3 + $0xa0] sm:$0xff]
          %v1040 = vld [vmem:[#allocation3 + $0xa8] sm:$0xff]
          %v1041 = vld [vmem:[#allocation3 + $0xb0] sm:$0xff]
          %v1042 = vld [vmem:[#allocation3 + $0xb8] sm:$0xff]
          %v1043 = vld [vmem:[#allocation3 + $0xc0] sm:$0xff]
          %v1044 = vld [vmem:[#allocation3 + $0xc8] sm:$0xff]
          %v1045 = vld [vmem:[#allocation3 + $0xd0] sm:$0xff]
          %v1046 = vld [vmem:[#allocation3 + $0xd8] sm:$0xff]
          %v1047 = vld [vmem:[#allocation3 + $0xe0] sm:$0xff]
          %v1048 = vld [vmem:[#allocation3 + $0xe8] sm:$0xff]
          %v1049 = vld [vmem:[#allocation3 + $0xf0] sm:$0xff]
          %v1050 = vld [vmem:[#allocation3 + $0xf8] sm:$0xff]
          %v1051 = vsel %vm753, %v1019, 0.0
          %v1052 = vsel %vm753, %v1020, 0.0
          %v1053 = vadd.f32 %v1051, %v1052
          %v1054 = vsel %vm753, %v1021, 0.0
          %v1055 = vadd.f32 %v1053, %v1054
          %v1056 = vsel %vm753, %v1022, 0.0
          %v1057 = vadd.f32 %v1055, %v1056
          %v1058 = vsel %vm753, %v1023, 0.0
          %v1059 = vadd.f32 %v1057, %v1058
          %v1060 = vsel %vm753, %v1024, 0.0
          %v1061 = vadd.f32 %v1059, %v1060
          %v1062 = vsel %vm753, %v1025, 0.0
          %v1063 = vadd.f32 %v1061, %v1062
          %v1064 = vsel %vm753, %v1026, 0.0
          %v1065 = vadd.f32 %v1063, %v1064
          %v1066 = vsel %vm753, %v1027, 0.0
          %v1067 = vadd.f32 %v1065, %v1066
          %v1068 = vsel %vm753, %v1028, 0.0
          %v1069 = vadd.f32 %v1067, %v1068
          %v1070 = vsel %vm753, %v1029, 0.0
          %v1071 = vadd.f32 %v1069, %v1070
          %v1072 = vsel %vm753, %v1030, 0.0
          %v1073 = vadd.f32 %v1071, %v1072
          %v1074 = vsel %vm753, %v1031, 0.0
          %v1075 = vadd.f32 %v1073, %v1074
          %v1076 = vsel %vm753, %v1032, 0.0
          %v1077 = vadd.f32 %v1075, %v1076
          %v1078 = vsel %vm753, %v1033, 0.0
          %v1079 = vadd.f32 %v1077, %v1078
          %v1080 = vsel %vm753, %v1034, 0.0
          %v1081 = vadd.f32 %v1079, %v1080
          %v1082 = vsel %vm753, %v1035, 0.0
          %v1083 = vadd.f32 %v1081, %v1082
          %v1084 = vsel %vm753, %v1036, 0.0
          %v1085 = vadd.f32 %v1083, %v1084
          %v1086 = vsel %vm753, %v1037, 0.0
          %v1087 = vadd.f32 %v1085, %v1086
          %v1088 = vsel %vm753, %v1038, 0.0
          %v1089 = vadd.f32 %v1087, %v1088
          %v1090 = vsel %vm753, %v1039, 0.0
          %v1091 = vadd.f32 %v1089, %v1090
          %v1092 = vsel %vm753, %v1040, 0.0
          %v1093 = vadd.f32 %v1091, %v1092
          %v1094 = vsel %vm753, %v1041, 0.0
          %v1095 = vadd.f32 %v1093, %v1094
          %v1096 = vsel %vm753, %v1042, 0.0
          %v1097 = vadd.f32 %v1095, %v1096
          %v1098 = vsel %vm753, %v1043, 0.0
          %v1099 = vadd.f32 %v1097, %v1098
          %v1100 = vsel %vm753, %v1044, 0.0
          %v1101 = vadd.f32 %v1099, %v1100
          %v1102 = vsel %vm753, %v1045, 0.0
          %v1103 = vadd.f32 %v1101, %v1102
          %v1104 = vsel %vm753, %v1046, 0.0
          %v1105 = vadd.f32 %v1103, %v1104
          %v1106 = vsel %vm753, %v1047, 0.0
          %v1107 = vadd.f32 %v1105, %v1106
          %v1108 = vsel %vm753, %v1048, 0.0
          %v1109 = vadd.f32 %v1107, %v1108
          %v1110 = vsel %vm753, %v1049, 0.0
          %v1111 = vadd.f32 %v1109, %v1110
          %v1112 = vsel %vm753, %v1050, 0.0
          %v1113 = vadd.f32 %v1111, %v1112
          %v1114 = vrot.slane %v1113, 4
          %v1115 = vadd.f32 %v1113, %v1114
          %v1116 = vrot.slane %v1115, 2
          %v1117 = vadd.f32 %v1115, %v1116
          %v1118 = vrot.slane %v1117, 1
          %v1119 = vadd.f32 %v1117, %v1118
          %v1120 = vadd.f32 %v1018, 1.0
          %v1121 = vadd.f32 %v1119, 1.0
          %v1122 = vrcp.pop %v1121
          %v1123 = vmul.f32 %v1120, %v1122
          %v1124 = vsub.f32 1.0, %v1123
          %vm1125 = vcmask 253952
          %1126 = vst.msk [vmem:[%s237] sm:$0x1] %vm1125, %v1124
        $region40: #{tpu_custom_call.1} parent=31 // pred_fallthru
          _
        %s1127 = sand.u32 %s121, 1
        %s1128 = scalar_lea.sflag [#allocation5], %s1127
        %s1129 = sand.u32 %s121, 1
        %s1130 = scalar_lea.vmem [#allocation4], %s1129
        // Predicated region
        $region41: #{tpu_custom_call.1} parent=31 // pred_check
          %p1131 = pneg %p131
        $region42: #{tpu_custom_call.1} parent=31 // pred_check_branch
          %1133 = sbr.rel (%p1131) target = $region44
        $region43: #{tpu_custom_call.1} parent=31 // pred_region
          %s1135 = ssub.s32 16, 16
          %1136 = vsyncadd %s1128, %s1135
          %s1137 = smul.addr %s21, 16
          %s1138 = scalar_lea.hbm %s3, %s1137
          %s1140 = sshll.u32 %s1130, 4
          %s1141 = int_to_ptr.vmem [resolvable:$true] %s1140
          %1143 = dma.vmem_to_hbm [thread:$0]  %s1141, 16, %s1138, %s1128
        $region44: #{tpu_custom_call.1} parent=31 // pred_fallthru
          _
      $region32: #{tpu_custom_call.1} parent=5 // pred_fallthru
        _
      %p1144 = scmp.le.s32.totalorder 2, %s12
      // Predicated region
      $region45: #{tpu_custom_call.1} parent=5 // pred_check
        %p1145 = pneg %p1144
      $region46: #{tpu_custom_call.1} parent=5 // pred_check_branch
        %1147 = sbr.rel (%p1145) target = $region48
      $region47: #{tpu_custom_call.1} parent=5 // pred_region
        %s1148 = ssub.s32 %s12, 2
        // Predicated region
        $region49: #{tpu_custom_call.1} parent=47 // pred_check
          %p1149 = pneg %p137
        $region50: #{tpu_custom_call.1} parent=47 // pred_check_branch
          %1151 = sbr.rel (%p1149) target = $region52
        $region51: #{tpu_custom_call.1} parent=47 // pred_region
          %s1152 = sand.u32 %s122, 1
          %s1153 = scalar_lea.sflag [#allocation5], %s1152
          %s1154 = sand.u32 %s122, 1
          %s1155 = scalar_lea.vmem [#allocation4], %s1154
          %1156 = dma.done %s1153, 16
        $region52: #{tpu_custom_call.1} parent=47 // pred_fallthru
          _
      $region48: #{tpu_custom_call.1} parent=5 // pred_fallthru
        _
    $region6: #{tpu_custom_call.1} parent=1 // loop_footer
      %s16 = sadd.s32 1, %s12
    $region7: #{tpu_custom_call.1} parent=1 // loop_footer_branch
      %11 = sbr.rel target = $region3
    $region8: #{tpu_custom_call.1} parent=1 // loop_exit
      _
    %1157 = vsyncpa [#allocation5], 1
    %s1158 = scalar_lea.sflag [#allocation5], 1
    %1159 = vsyncpa %s1158, 1

</llo_original>
